<compile_context>
chip_gen: v5e
topology: v5e:2x2
jax: 0.10.0
libtpu: 0.0.40
codegen_flags: <defaults>
</compile_context>

<pallas_src>
import jax
import jax.numpy as jnp
from jax.experimental import pallas as pl
from jax.experimental.pallas import tpu as pltpu


def _round_up(n, m):
    return ((n + m - 1) // m) * m


def _gemm_bias_kernel(x_ref, w_ref, b_ref, out_ref):
    # out = x @ W_eff + b_eff : single MXU pass per row tile, f32 accumulation,
    # bias added as a [1, Dout] operand (sublane broadcast, nothing materialized).
    acc = jnp.dot(x_ref[...], w_ref[...], preferred_element_type=jnp.float32)
    out_ref[...] = (acc + b_ref[...]).astype(out_ref.dtype)


def _collapse_linear_stack(w_pre, b_pre, w_res, b_res, w_post, b_post, num_layers):
    """Fold pre / continuous / post Linear layers into one (W_eff, b_eff).

    There is no nonlinearity in the continuous block, so
        h_{k+1} = h_k + h_k @ W_res^T + b_res = h_k @ A + b_res,  A = I + W_res^T
        h_N     = h_0 @ A^N + b_res @ (I + A + ... + A^{N-1})
    and the whole model is out = x @ W_eff + b_eff (exact in exact arithmetic).
    """
    f32 = jnp.float32
    H = w_res.shape[0]
    wpre_t = w_pre.astype(f32).T            # [Din, H]
    wres_t = w_res.astype(f32).T            # [H, H]
    wpost_t = w_post.astype(f32).T          # [H, Dout]

    A = jnp.eye(H, dtype=f32) + wres_t
    P = jnp.eye(H, dtype=f32)               # -> A^num_layers
    S = jnp.zeros((H, H), dtype=f32)        # -> I + A + ... + A^{num_layers-1}
    for _ in range(num_layers):             # num_layers tiny HxH GEMMs, done once
        S = S + P
        P = P @ A

    PW = P @ wpost_t                        # [H, Dout]
    w_eff = wpre_t @ PW                     # [Din, Dout]
    b_eff = (b_pre.astype(f32) @ PW
             + b_res.astype(f32) @ (S @ wpost_t)
             + b_post.astype(f32))          # [Dout]
    return w_eff, b_eff


def _build_pallas_call(M, Din, Dout, tile_m, out_dtype, use_buffered):
    grid_m = pl.cdiv(M, tile_m)
    # Constant-index weight/bias blocks: double buffering is pure VMEM waste.
    weight_mode = {"pipeline_mode": pl.Buffered(1)} if use_buffered else {}

    bpe = 4  # f32
    tile_bytes = 2 * tile_m * (Din + Dout) * bpe       # double-buffered x / out tiles
    wgt_bytes = 2 * (Din * Dout + Dout) * bpe          # (at most) double-buffered weights
    vmem_limit = int(min(64 * 1024 * 1024,
                         max(8 * 1024 * 1024, 4 * (tile_bytes + wgt_bytes))))

    cost = pl.CostEstimate(
        flops=2 * M * Din * Dout,
        transcendentals=0,
        bytes_accessed=bpe * (M * Din + M * Dout + Din * Dout + Dout))

    return pl.pallas_call(
        _gemm_bias_kernel,
        out_shape=jax.ShapeDtypeStruct((M, Dout), out_dtype),
        grid_spec=pltpu.PrefetchScalarGridSpec(
            num_scalar_prefetch=0,
            grid=(grid_m,),
            in_specs=[
                pl.BlockSpec((tile_m, Din), lambda i: (i, 0)),               # x tile
                pl.BlockSpec((Din, Dout), lambda i: (0, 0), **weight_mode),  # W_eff
                pl.BlockSpec((1, Dout), lambda i: (0, 0), **weight_mode),    # b_eff
            ],
            out_specs=pl.BlockSpec((tile_m, Dout), lambda i: (i, 0)),
        ),
        compiler_params=pltpu.CompilerParams(
            dimension_semantics=("parallel",),
            vmem_limit_bytes=vmem_limit),
        cost_estimate=cost,
    )


def model_forward(x, w_pre, b_pre, w_res, b_res, w_post, b_post, *,
                  num_layers, tile_m=512):
    """x: [B, S, Din] -> [B, S, Dout]  (PyTorch Linear semantics: y = x @ W.T + b)."""
    B, S, Din = x.shape
    Dout = w_post.shape[0]
    M = B * S
    f32 = jnp.float32

    # Collapse the purely-linear stack once in the wrapper.
    w_eff, b_eff = _collapse_linear_stack(w_pre, b_pre, w_res, b_res,
                                          w_post, b_post, num_layers)
    b_eff2 = b_eff.reshape(1, Dout)

    # No padded HBM copy of x: reshape is free; cast only if needed.
    x2d = x.reshape(M, Din)
    if x2d.dtype != f32:
        x2d = x2d.astype(f32)

    # Row tile: multiple of 8 sublanes, large enough to amortize per-step overhead,
    # but capped so grid_m >= 2 when possible (v7x megacore) and never exceeding M.
    tile_m = max(8, min(tile_m,
                        _round_up(pl.cdiv(M, 2), 8),
                        _round_up(M, 8)))

    try:
        call = _build_pallas_call(M, Din, Dout, tile_m, x.dtype, use_buffered=True)
        out2d = call(x2d, w_eff, b_eff2)
    except Exception:
        # Fallback if this JAX build rejects BlockSpec pipeline_mode / Buffered(1).
        call = _build_pallas_call(M, Din, Dout, tile_m, x.dtype, use_buffered=False)
        out2d = call(x2d, w_eff, b_eff2)

    return out2d.reshape(B, S, Dout)


def reference_forward(x, w_pre, b_pre, w_res, b_res, w_post, b_post, *, num_layers):
    # Layer-by-layer reference (matches the PyTorch module's summation order).
    h = jnp.einsum("bsd,hd->bsh", x, w_pre) + b_pre
    for _ in range(num_layers):
        h = h + (jnp.einsum("bsh,gh->bsg", h, w_res) + b_res)
    return jnp.einsum("bsh,oh->bso", h, w_post) + b_post


def _make_case(key, B, S, Din, H, Dout):
    kx, k1, k2, k3 = jax.random.split(key, 4)
    x = jax.random.normal(kx, (B, S, Din), dtype=jnp.float32)
    # Std scaled down so the residual stack stays well-conditioned for the check.
    w_pre = 0.05 * jax.random.normal(k1, (H, Din), dtype=jnp.float32)
    b_pre = 0.01 * jnp.ones((H,), dtype=jnp.float32)
    w_res = 0.05 * jax.random.normal(k2, (H, H), dtype=jnp.float32)
    b_res = 0.01 * jnp.ones((H,), dtype=jnp.float32)
    w_post = 0.05 * jax.random.normal(k3, (Dout, H), dtype=jnp.float32)
    b_post = 0.01 * jnp.ones((Dout,), dtype=jnp.float32)
    return (x, w_pre, b_pre, w_res, b_res, w_post, b_post)


if __name__ == "__main__":
    key = jax.random.PRNGKey(0)

    # TODO(synk): loss/criterion, accuracy counters and `hidden_states` bookkeeping of
    # static_forward are host-side / dynamic-dict logic with no Pallas equivalent.

    # Case 1: evenly tiled rows, 32-wide features, 4 shared residual layers.
    args1 = _make_case(jax.random.fold_in(key, 1), B=2, S=8, Din=32, H=32, Dout=32)
    out1 = jax.block_until_ready(model_forward(*args1, num_layers=4))
    ref1 = reference_forward(*args1, num_layers=4)
    assert out1.shape == ref1.shape
    assert jnp.allclose(out1, ref1, atol=1e-4, rtol=1e-4), \
        float(jnp.max(jnp.abs(out1 - ref1)))

    # Case 2: ragged last row tile + non-multiple-of-128 feature dims.
    args2 = _make_case(jax.random.fold_in(key, 2), B=2, S=7, Din=24, H=40, Dout=20)
    out2 = jax.block_until_ready(model_forward(*args2, num_layers=3))
    ref2 = reference_forward(*args2, num_layers=3)
    assert out2.shape == ref2.shape
    assert jnp.allclose(out2, ref2, atol=1e-4, rtol=1e-4), \
        float(jnp.max(jnp.abs(out2 - ref2)))

    print("KERNEL_OK")
</pallas_src>

<mosaic_0001>
module attributes {stable_mosaic.version = 11 : i64} {
  func.func @_gemm_bias_kernel(%arg0: i32, %arg1: memref<8x32xf32, #tpu.memory_space<vmem>>, %arg2: memref<32x32xf32, #tpu.memory_space<vmem>>, %arg3: memref<1x32xf32, #tpu.memory_space<vmem>>, %arg4: memref<8x32xf32, #tpu.memory_space<vmem>>) attributes {dimension_semantics = [#tpu.dimension_semantics<parallel>], iteration_bounds = array<i64: 2>, scalar_prefetch = 0 : i64, scratch_operands = 0 : i64, tpu.core_type = #tpu.core_type<tc>, window_params = [{transform_indices = @transform_0, window_bounds = array<i64: 8, 32>}, {pipeline_mode = #tpu.pipeline_mode<synchronous>, transform_indices = @transform_1, window_bounds = array<i64: 32, 32>}, {pipeline_mode = #tpu.pipeline_mode<synchronous>, transform_indices = @transform_2, window_bounds = array<i64: 1, 32>}, {transform_indices = @transform_3, window_bounds = array<i64: 8, 32>}]} {
    %c0 = arith.constant 0 : index
    %c0_0 = arith.constant 0 : index
    %0 = vector.load %arg1[%c0, %c0_0] : memref<8x32xf32, #tpu.memory_space<vmem>>, vector<8x32xf32>
    %c0_1 = arith.constant 0 : index
    %c0_2 = arith.constant 0 : index
    %1 = vector.load %arg2[%c0_1, %c0_2] : memref<32x32xf32, #tpu.memory_space<vmem>>, vector<32x32xf32>
    %cst = arith.constant dense<0.000000e+00> : vector<8x32xf32>
    %2 = tpu.matmul %0, %1, %cst {dimension_numbers = #tpu.dot_dimension_numbers<[1], [0], [0], [1], [0, 0, 1, 1], [], []>} : vector<8x32xf32>, vector<32x32xf32>, vector<8x32xf32> -> vector<8x32xf32>
    %c0_3 = arith.constant 0 : index
    %c0_4 = arith.constant 0 : index
    %3 = vector.load %arg3[%c0_3, %c0_4] : memref<1x32xf32, #tpu.memory_space<vmem>>, vector<1x32xf32>
    %4 = vector.broadcast %3 : vector<1x32xf32> to vector<8x32xf32>
    %5 = arith.addf %2, %4 : vector<8x32xf32>
    %c0_5 = arith.constant 0 : index
    %c0_6 = arith.constant 0 : index
    %6 = vector.load %arg4[%c0_5, %c0_6] : memref<8x32xf32, #tpu.memory_space<vmem>>, vector<8x32xf32>
    tpu.vector_store %arg4[%c0_5, %c0_6], %5 {strides = array<i32>} : memref<8x32xf32, #tpu.memory_space<vmem>>, vector<8x32xf32>,
    return
  }
  func.func @transform_0(%arg0: i32) -> (i32, i32) {
    %c0_i32 = arith.constant 0 : i32
    %c0_i32_0 = arith.constant 0 : i32
    return %arg0, %c0_i32 : i32, i32
  }
  func.func @transform_1(%arg0: i32) -> (i32, i32) {
    %c0_i32 = arith.constant 0 : i32
    %c0_i32_0 = arith.constant 0 : i32
    %c0_i32_1 = arith.constant 0 : i32
    return %c0_i32, %c0_i32_0 : i32, i32
  }
  func.func @transform_2(%arg0: i32) -> (i32, i32) {
    %c0_i32 = arith.constant 0 : i32
    %c0_i32_0 = arith.constant 0 : i32
    %c0_i32_1 = arith.constant 0 : i32
    return %c0_i32, %c0_i32_0 : i32, i32
  }
  func.func @transform_3(%arg0: i32) -> (i32, i32) {
    %c0_i32 = arith.constant 0 : i32
    %c0_i32_0 = arith.constant 0 : i32
    return %arg0, %c0_i32 : i32, i32
  }
}

module attributes {stable_mosaic.version = 11 : i64} {
  func.func @_gemm_bias_kernel(%arg0: i32, %arg1: memref<8x32xf32, #tpu.memory_space<vmem>>, %arg2: memref<32x32xf32, #tpu.memory_space<vmem>>, %arg3: memref<1x32xf32, #tpu.memory_space<vmem>>, %arg4: memref<8x32xf32, #tpu.memory_space<vmem>>) attributes {dimension_semantics = [#tpu.dimension_semantics<parallel>], iteration_bounds = array<i64: 2>, scalar_prefetch = 0 : i64, scratch_operands = 0 : i64, tpu.core_type = #tpu.core_type<tc>, window_params = [{transform_indices = @transform_0, window_bounds = array<i64: 8, 32>}, {pipeline_mode = #tpu.pipeline_mode<synchronous>, transform_indices = @transform_1, window_bounds = array<i64: 32, 32>}, {pipeline_mode = #tpu.pipeline_mode<synchronous>, transform_indices = @transform_2, window_bounds = array<i64: 1, 32>}, {transform_indices = @transform_3, window_bounds = array<i64: 8, 32>}]} {
    %c0 = arith.constant 0 : index
    %c0_0 = arith.constant 0 : index
    %0 = vector.load %arg1[%c0, %c0_0] : memref<8x32xf32, #tpu.memory_space<vmem>>, vector<8x32xf32>
    %c0_1 = arith.constant 0 : index
    %c0_2 = arith.constant 0 : index
    %1 = vector.load %arg2[%c0_1, %c0_2] : memref<32x32xf32, #tpu.memory_space<vmem>>, vector<32x32xf32>
    %cst = arith.constant dense<0.000000e+00> : vector<8x32xf32>
    %2 = tpu.matmul %0, %1, %cst {dimension_numbers = #tpu.dot_dimension_numbers<[1], [0], [0], [1], [0, 0, 1, 1], [], []>} : vector<8x32xf32>, vector<32x32xf32>, vector<8x32xf32> -> vector<8x32xf32>
    %c0_3 = arith.constant 0 : index
    %c0_4 = arith.constant 0 : index
    %3 = vector.load %arg3[%c0_3, %c0_4] : memref<1x32xf32, #tpu.memory_space<vmem>>, vector<1x32xf32>
    %4 = vector.broadcast %3 : vector<1x32xf32> to vector<8x32xf32>
    %5 = arith.addf %2, %4 : vector<8x32xf32>
    %c0_5 = arith.constant 0 : index
    %c0_6 = arith.constant 0 : index
    %6 = vector.load %arg4[%c0_5, %c0_6] : memref<8x32xf32, #tpu.memory_space<vmem>>, vector<8x32xf32>
    tpu.vector_store %arg4[%c0_5, %c0_6], %5 {strides = array<i32>} : memref<8x32xf32, #tpu.memory_space<vmem>>, vector<8x32xf32>,
    return
  }
  func.func @transform_0(%arg0: i32) -> (i32, i32) {
    %c0_i32 = arith.constant 0 : i32
    %c0_i32_0 = arith.constant 0 : i32
    return %arg0, %c0_i32 : i32, i32
  }
  func.func @transform_1(%arg0: i32) -> (i32, i32) {
    %c0_i32 = arith.constant 0 : i32
    %c0_i32_0 = arith.constant 0 : i32
    %c0_i32_1 = arith.constant 0 : i32
    return %c0_i32, %c0_i32_0 : i32, i32
  }
  func.func @transform_2(%arg0: i32) -> (i32, i32) {
    %c0_i32 = arith.constant 0 : i32
    %c0_i32_0 = arith.constant 0 : i32
    %c0_i32_1 = arith.constant 0 : i32
    return %c0_i32, %c0_i32_0 : i32, i32
  }
  func.func @transform_3(%arg0: i32) -> (i32, i32) {
    %c0_i32 = arith.constant 0 : i32
    %c0_i32_0 = arith.constant 0 : i32
    return %arg0, %c0_i32 : i32, i32
  }
}

</mosaic_0001>

<llo_original>
// kernel: tpu_custom_call.1
$region0: #{tpu_custom_call.1}
  #allocation0 [shape = 'u32[]', space=smem, size = 0x4, offset = 0x4, fixed_abs, tag = 'smem constant byte address 0x4 - core index']
  #allocation1 [shape = 'u32[72,128]{1,0:T(1,128)}', space=vmem, size = 0x9000, scoped, tag = 'internal scratch']
  %s0 = inlined_call_operand.hbm [shape: f32[16,32], index: 0, kind: input, shape index: {}]
  %s1 = inlined_call_operand.hbm [shape: f32[32,32], index: 1, kind: input, shape index: {}]
  %s2 = inlined_call_operand.vmem [shape: f32[1,32], index: 2, kind: input, shape index: {}]
  %s3 = inlined_call_operand.hbm [shape: f32[16,32], index: 3, kind: output, shape index: {}]
  %s4 = sld [smem:[#allocation0]]
  $region53: #{tpu_custom_call.1} parent=0
    _
  %s6 = ssub.s32 1, %s4
  %s7 = scalar_select 0, %s6, %s4
  $region1: #{tpu_custom_call.1} parent=0
    #allocation2 [shape = 'u8[8192]{0}', space=vmem, size = 0x2000, scoped, tag = 'input window, operand 0']
    #allocation3 [shape = 's32[2]{0}', space=sflag, size = 0x8, scoped, tag = 'scoped memory for tpu_custom_call.1']
    #allocation4 [shape = 's32[2]{0}', space=sflag, size = 0x8, scoped, tag = 'scoped memory for tpu_custom_call.1']
    #allocation5 [shape = 'u8[16384]{0}', space=vmem, size = 0x4000, scoped, tag = 'input window, operand 1, single buffered']
    #allocation6 [shape = 's32[1]{0}', space=sflag, size = 0x4, scoped, tag = 'scoped memory for tpu_custom_call.1']
    #allocation7 [shape = 'u8[8192]{0}', space=vmem, size = 0x2000, scoped, tag = 'output window, operand 0']
    %8 = vsyncpa [#allocation3], 0
    %s9 = scalar_lea.sflag [#allocation3], 1
    %10 = vsyncpa %s9, 0
    %11 = vsyncpa [#allocation6], 0
    %12 = vsyncpa [#allocation4], 0
    %s13 = scalar_lea.sflag [#allocation4], 1
    %14 = vsyncpa %s13, 0
    loop: start=0, step=1, limit=4
    $region2: #{tpu_custom_call.1} parent=1 // loop_pre_header
      _
    $region3: #{tpu_custom_call.1} parent=1 // loop_header
      %s16 = sphi 0, %s20
      %p17 = scmp.ge.s32.totalorder %s16, 4
      %s26 = sphi 0, %s28
      %s29 = sphi 0, %s26
      %s30 = sphi 0, %s29
      %s46 = sphi 0, %s30
      %s50 = sphi 0, %s50
      %s52 = sphi 0, %s50
      %s53 = sphi 0, %s52
      %s67 = sphi 0, %s53
      %s71 = sphi 0, %s71
      %s73 = sphi 0, %s71
      %s74 = sphi 0, %s73
      %s88 = sphi 0, %s74
      %s94 = sphi 0, %s96
      %s97 = sphi 0, %s94
      %s98 = sphi 0, %s97
      %s114 = sphi 0, %s98
    $region4: #{tpu_custom_call.1} parent=1 // loop_header_branch
      %19 = sbr.rel (%p17) target = $region8
    $region5: #{tpu_custom_call.1} parent=1 // loop_body
      %s21 = ssub.s32 %s16, 1
      %s22 = ssub.s32 %s16, 2
      %s23 = sadd.s32 %s16, 1
      %s24 = ssub.s32 %s16, %s23
      %p25 = scmp.eq.s32.totalorder %s24, 0
      %s27 = sadd.s32 %s26, 1
      %s28 = scalar_select %p25, %s26, %s27
      %p31 = pneg %p25
      %p32 = scmp.eq.s32.totalorder %s16, 1
      %p33 = por %p31, %p32
      %p34 = scmp.ne.s32.totalorder %s26, %s29
      %p35 = scmp.eq.s32.totalorder %s16, 0
      %p36 = por %p34, %p35
      %p37 = scmp.ne.s32.totalorder %s26, %s29
      %p38 = scmp.eq.s32.totalorder %s21, 1
      %p39 = por %p37, %p38
      %p40 = scmp.ne.s32.totalorder %s29, %s30
      %p41 = scmp.eq.s32.totalorder %s21, 0
      %p42 = por %p40, %p41
      %p43 = scmp.ne.s32.totalorder %s29, %s30
      %p44 = scmp.eq.s32.totalorder %s22, 1
      %p45 = por %p43, %p44
      %p47 = scmp.ne.s32.totalorder %s30, %s46
      %p48 = scmp.eq.s32.totalorder %s22, 0
      %p49 = por %p47, %p48
      %s51 = sadd.s32 %s50, 1
      %p54 = scmp.eq.s32.totalorder %s16, 1
      %p55 = scmp.ne.s32.totalorder %s50, %s52
      %p56 = scmp.eq.s32.totalorder %s16, 0
      %p57 = por %p55, %p56
      %p58 = scmp.ne.s32.totalorder %s50, %s52
      %p59 = scmp.eq.s32.totalorder %s21, 1
      %p60 = por %p58, %p59
      %p61 = scmp.ne.s32.totalorder %s52, %s53
      %p62 = scmp.eq.s32.totalorder %s21, 0
      %p63 = por %p61, %p62
      %p64 = scmp.ne.s32.totalorder %s52, %s53
      %p65 = scmp.eq.s32.totalorder %s22, 1
      %p66 = por %p64, %p65
      %p68 = scmp.ne.s32.totalorder %s53, %s67
      %p69 = scmp.eq.s32.totalorder %s22, 0
      %p70 = por %p68, %p69
      %s72 = sadd.s32 %s71, 1
      %p75 = scmp.eq.s32.totalorder %s16, 1
      %p76 = scmp.ne.s32.totalorder %s71, %s73
      %p77 = scmp.eq.s32.totalorder %s16, 0
      %p78 = por %p76, %p77
      %p79 = scmp.ne.s32.totalorder %s71, %s73
      %p80 = scmp.eq.s32.totalorder %s21, 1
      %p81 = por %p79, %p80
      %p82 = scmp.ne.s32.totalorder %s73, %s74
      %p83 = scmp.eq.s32.totalorder %s21, 0
      %p84 = por %p82, %p83
      %p85 = scmp.ne.s32.totalorder %s73, %s74
      %p86 = scmp.eq.s32.totalorder %s22, 1
      %p87 = por %p85, %p86
      %p89 = scmp.ne.s32.totalorder %s74, %s88
      %p90 = scmp.eq.s32.totalorder %s22, 0
      %p91 = por %p89, %p90
      %s92 = ssub.s32 %s16, %s23
      %p93 = scmp.eq.s32.totalorder %s92, 0
      %s95 = sadd.s32 %s94, 1
      %s96 = scalar_select %p93, %s94, %s95
      %p99 = pneg %p93
      %p100 = scmp.eq.s32.totalorder %s16, 1
      %p101 = por %p99, %p100
      %p102 = scmp.ne.s32.totalorder %s94, %s97
      %p103 = scmp.eq.s32.totalorder %s16, 0
      %p104 = por %p102, %p103
      %p105 = scmp.ne.s32.totalorder %s94, %s97
      %p106 = scmp.eq.s32.totalorder %s21, 1
      %p107 = por %p105, %p106
      %p108 = scmp.ne.s32.totalorder %s97, %s98
      %p109 = scmp.eq.s32.totalorder %s21, 0
      %p110 = por %p108, %p109
      %p111 = scmp.ne.s32.totalorder %s97, %s98
      %p112 = scmp.eq.s32.totalorder %s22, 1
      %p113 = por %p111, %p112
      %p115 = scmp.ne.s32.totalorder %s98, %s114
      %p116 = scmp.eq.s32.totalorder %s22, 0
      %p117 = por %p115, %p116
      %p118 = scmp.le.s32.totalorder 1, %s16
      %p119 = scmp.lt.s32.totalorder %s16, 3
      %p120 = pnand %p118, %p119
      %p121 = pneg %p120
      // Predicated region
      $region9: #{tpu_custom_call.1} parent=5 // pred_check
        _
      $region10: #{tpu_custom_call.1} parent=5 // pred_check_branch
        %123 = sbr.rel (%p120) target = $region12
      $region11: #{tpu_custom_call.1} parent=5 // pred_region
        %s124 = ssub.s32 %s16, 1
        // Predicated region
        $region13: #{tpu_custom_call.1} parent=11 // pred_check
          %p125 = pneg %p63
        $region14: #{tpu_custom_call.1} parent=11 // pred_check_branch
          %127 = sbr.rel (%p125) target = $region16
        $region15: #{tpu_custom_call.1} parent=11 // pred_region
          %129 = vsyncadd [#allocation6], 0
          %s130 = sshll.u32 %s1, 4
          %s131 = int_to_ptr.hbm [resolvable:$true] %s130
          %s132 = sshll.u32 [#allocation5], 4
          %s133 = int_to_ptr.vmem [resolvable:$true] %s132
          %138 = dma.hbm_to_vmem [thread:$0]  %s131, 512, %s133, [#allocation6], 128, 128, 8
        $region16: #{tpu_custom_call.1} parent=11 // pred_fallthru
          _
        // Predicated region
        $region17: #{tpu_custom_call.1} parent=11 // pred_check
          %p139 = pneg %p84
        $region18: #{tpu_custom_call.1} parent=11 // pred_check_branch
          %141 = sbr.rel (%p139) target = $region20
        $region19: #{tpu_custom_call.1} parent=11 // pred_region
          _
        $region20: #{tpu_custom_call.1} parent=11 // pred_fallthru
          _
      $region12: #{tpu_custom_call.1} parent=5 // pred_fallthru
        _
      %p142 = scmp.lt.s32.totalorder %s16, 2
      // Predicated region
      $region21: #{tpu_custom_call.1} parent=5 // pred_check
        %p143 = pneg %p142
      $region22: #{tpu_custom_call.1} parent=5 // pred_check_branch
        %145 = sbr.rel (%p143) target = $region24
      $region23: #{tpu_custom_call.1} parent=5 // pred_region
        // Predicated region
        $region25: #{tpu_custom_call.1} parent=23 // pred_check
          %p146 = pneg %p36
        $region26: #{tpu_custom_call.1} parent=23 // pred_check_branch
          %148 = sbr.rel (%p146) target = $region28
        $region27: #{tpu_custom_call.1} parent=23 // pred_region
          %s149 = sand.u32 %s26, 1
          %s150 = scalar_lea.sflag [#allocation3], %s149
          %s151 = sand.u32 %s26, 1
          %s152 = smul.addr %s151, 8
          %s153 = scalar_lea.vmem [#allocation2], %s152
          %155 = vsyncadd %s150, 0
          %s156 = smul.addr %s16, 8
          %s157 = scalar_lea.hbm %s0, %s156
          %s159 = sshll.u32 %s157, 4
          %s160 = int_to_ptr.hbm [resolvable:$true] %s159
          %s161 = sshll.u32 %s153, 4
          %s162 = int_to_ptr.vmem [resolvable:$true] %s161
          %164 = dma.hbm_to_vmem [thread:$0]  %s160, 128, %s162, %s150
        $region28: #{tpu_custom_call.1} parent=23 // pred_fallthru
          _
      $region24: #{tpu_custom_call.1} parent=5 // pred_fallthru
        _
      %p165 = scmp.le.s32.totalorder 1, %s16
      %p166 = scmp.lt.s32.totalorder %s16, 3
      %p167 = pnand %p165, %p166
      %p168 = pneg %p167
      // Predicated region
      $region29: #{tpu_custom_call.1} parent=5 // pred_check
        _
      $region30: #{tpu_custom_call.1} parent=5 // pred_check_branch
        %170 = sbr.rel (%p167) target = $region32
      $region31: #{tpu_custom_call.1} parent=5 // pred_region
        %s171 = ssub.s32 %s16, 1
        %s172 = sand.u32 %s29, 1
        %s173 = scalar_lea.sflag [#allocation3], %s172
        %s174 = sand.u32 %s29, 1
        %s175 = smul.addr %s174, 8
        %s176 = scalar_lea.vmem [#allocation2], %s175
        // Predicated region
        $region33: #{tpu_custom_call.1} parent=31 // pred_check
          %p177 = pneg %p42
        $region34: #{tpu_custom_call.1} parent=31 // pred_check_branch
          %179 = sbr.rel (%p177) target = $region36
        $region35: #{tpu_custom_call.1} parent=31 // pred_region
          %181 = dma.done %s173, 128
        $region36: #{tpu_custom_call.1} parent=31 // pred_fallthru
          _
        // Predicated region
        $region37: #{tpu_custom_call.1} parent=31 // pred_check
          %p182 = pneg %p63
        $region38: #{tpu_custom_call.1} parent=31 // pred_check_branch
          %184 = sbr.rel (%p182) target = $region40
        $region39: #{tpu_custom_call.1} parent=31 // pred_region
          %186 = dma.done [#allocation6], 512
        $region40: #{tpu_custom_call.1} parent=31 // pred_fallthru
          _
        %s187 = sand.u32 %s29, 1
        %s188 = scalar_lea.sflag [#allocation3], %s187
        %s189 = sand.u32 %s29, 1
        %s190 = smul.addr %s189, 8
        %s191 = scalar_lea.vmem [#allocation2], %s190
        %p192 = pneg %p42
        %p193 = pneg %p39
        %p194 = pneg %p63
        %p195 = pneg %p60
        %p196 = pneg %p84
        %p197 = pneg %p81
        %p198 = pneg %p110
        %p199 = pneg %p107
        %s200 = sand.u32 %s97, 1
        %s201 = scalar_lea.sflag [#allocation4], %s200
        %s202 = sand.u32 %s97, 1
        %s203 = smul.addr %s202, 8
        %s204 = scalar_lea.vmem [#allocation7], %s203
        %v205 = vld [vmem:[%s176] sm:$0xff]
        %v206 = vld [vmem:[#allocation5] sm:$0xff]
        %v207 = vld [vmem:[#allocation5 + $0x8] sm:$0xff]
        %v208 = vld [vmem:[#allocation5 + $0x10] sm:$0xff]
        %v209 = vld [vmem:[#allocation5 + $0x18] sm:$0xff]
        %v210 = vld [vmem:[%s2] sm:$0x1]
        %v212 = vperm.slane %v210, 0
        %vm214 = vcmask 261120
        %v216 = vsel %vm214, %v205, 0
        %218 = vmatpush.msra.mxu0 0.0
        %219 = vmatpush.msra.mxu0 0.0
        %220 = vmatpush.msra.mxu0 0.0
        %221 = vmatpush.msra.mxu0 0.0
        %222 = vmatpush.msra.mxu0 0.0
        %223 = vmatpush.msra.mxu0 0.0
        %224 = vmatpush.msra.mxu0 0.0
        %225 = vmatpush.msra.mxu0 0.0
        %226 = vmatpush.msra.mxu0 0.0
        %227 = vmatpush.msra.mxu0 0.0
        %228 = vmatpush.msra.mxu0 0.0
        %229 = vmatpush.msra.mxu0 0.0
        %230 = vmatpush.msra.mxu0 %v209
        %231 = vmatpush.msra.mxu0 %v208
        %232 = vmatpush.msra.mxu0 %v207
        %233 = vmatpush.msra.mxu0 %v206
        %234 = vmatmul.f32.gmra.mxu0 %v216
        %v235 = vpop.f32.mrf.mxu0
        %v236 = vadd.f32 %v212, %v235
        %237 = vdwg.mxu0
        %238 = vst.msk [vmem:[%s204] sm:$0xff] %vm214, %v236
        %s239 = sand.u32 %s97, 1
        %s240 = scalar_lea.sflag [#allocation4], %s239
        %s241 = sand.u32 %s97, 1
        %s242 = smul.addr %s241, 8
        %s243 = scalar_lea.vmem [#allocation7], %s242
        // Predicated region
        $region41: #{tpu_custom_call.1} parent=31 // pred_check
          %p244 = pneg %p107
        $region42: #{tpu_custom_call.1} parent=31 // pred_check_branch
          %246 = sbr.rel (%p244) target = $region44
        $region43: #{tpu_custom_call.1} parent=31 // pred_region
          %248 = vsyncadd %s240, 0
          %s249 = smul.addr %s21, 8
          %s250 = scalar_lea.hbm %s3, %s249
          %s252 = sshll.u32 %s243, 4
          %s253 = int_to_ptr.vmem [resolvable:$true] %s252
          %s254 = sshll.u32 %s250, 4
          %s255 = int_to_ptr.hbm [resolvable:$true] %s254
          %257 = dma.vmem_to_hbm [thread:$0]  %s253, 128, %s255, %s240
        $region44: #{tpu_custom_call.1} parent=31 // pred_fallthru
          _
      $region32: #{tpu_custom_call.1} parent=5 // pred_fallthru
        _
      %p258 = scmp.le.s32.totalorder 2, %s16
      // Predicated region
      $region45: #{tpu_custom_call.1} parent=5 // pred_check
        %p259 = pneg %p258
      $region46: #{tpu_custom_call.1} parent=5 // pred_check_branch
        %261 = sbr.rel (%p259) target = $region48
      $region47: #{tpu_custom_call.1} parent=5 // pred_region
        %s262 = ssub.s32 %s16, 2
        // Predicated region
        $region49: #{tpu_custom_call.1} parent=47 // pred_check
          %p263 = pneg %p113
        $region50: #{tpu_custom_call.1} parent=47 // pred_check_branch
          %265 = sbr.rel (%p263) target = $region52
        $region51: #{tpu_custom_call.1} parent=47 // pred_region
          %s266 = sand.u32 %s98, 1
          %s267 = scalar_lea.sflag [#allocation4], %s266
          %s268 = sand.u32 %s98, 1
          %s269 = smul.addr %s268, 8
          %s270 = scalar_lea.vmem [#allocation7], %s269
          %272 = dma.done %s267, 128
        $region52: #{tpu_custom_call.1} parent=47 // pred_fallthru
          _
      $region48: #{tpu_custom_call.1} parent=5 // pred_fallthru
        _
    $region6: #{tpu_custom_call.1} parent=1 // loop_footer
      %s20 = sadd.s32 1, %s16
    $region7: #{tpu_custom_call.1} parent=1 // loop_footer_branch
      %15 = sbr.rel target = $region3
    $region8: #{tpu_custom_call.1} parent=1 // loop_exit
      _
    %273 = vsyncpa [#allocation3], 1
    %s274 = scalar_lea.sflag [#allocation3], 1
    %275 = vsyncpa %s274, 1
    %276 = vsyncpa [#allocation6], 1
    %277 = vsyncpa [#allocation4], 1
    %s278 = scalar_lea.sflag [#allocation4], 1
    %279 = vsyncpa %s278, 1

// kernel: tpu_custom_call.1
$region0: #{tpu_custom_call.1}
  #allocation0 [shape = 'u32[]', space=smem, size = 0x4, offset = 0x4, fixed_abs, tag = 'smem constant byte address 0x4 - core index']
  #allocation1 [shape = 'u32[72,128]{1,0:T(1,128)}', space=vmem, size = 0x9000, scoped, tag = 'internal scratch']
  %s0 = inlined_call_operand.hbm [shape: f32[16,32], index: 0, kind: input, shape index: {}]
  %s1 = inlined_call_operand.hbm [shape: f32[32,32], index: 1, kind: input, shape index: {}]
  %s2 = inlined_call_operand.vmem [shape: f32[1,32], index: 2, kind: input, shape index: {}]
  %s3 = inlined_call_operand.hbm [shape: f32[16,32], index: 3, kind: output, shape index: {}]
  %s4 = sld [smem:[#allocation0]]
  $region53: #{tpu_custom_call.1} parent=0
    _
  %s6 = ssub.s32 1, %s4
  %s7 = scalar_select 0, %s6, %s4
  $region1: #{tpu_custom_call.1} parent=0
    #allocation2 [shape = 'u8[8192]{0}', space=vmem, size = 0x2000, scoped, tag = 'input window, operand 0']
    #allocation3 [shape = 's32[2]{0}', space=sflag, size = 0x8, scoped, tag = 'scoped memory for tpu_custom_call.1']
    #allocation4 [shape = 's32[2]{0}', space=sflag, size = 0x8, scoped, tag = 'scoped memory for tpu_custom_call.1']
    #allocation5 [shape = 'u8[16384]{0}', space=vmem, size = 0x4000, scoped, tag = 'input window, operand 1, single buffered']
    #allocation6 [shape = 's32[1]{0}', space=sflag, size = 0x4, scoped, tag = 'scoped memory for tpu_custom_call.1']
    #allocation7 [shape = 'u8[8192]{0}', space=vmem, size = 0x2000, scoped, tag = 'output window, operand 0']
    %8 = vsyncpa [#allocation3], 0
    %s9 = scalar_lea.sflag [#allocation3], 1
    %10 = vsyncpa %s9, 0
    %11 = vsyncpa [#allocation6], 0
    %12 = vsyncpa [#allocation4], 0
    %s13 = scalar_lea.sflag [#allocation4], 1
    %14 = vsyncpa %s13, 0
    loop: start=0, step=1, limit=4
    $region2: #{tpu_custom_call.1} parent=1 // loop_pre_header
      _
    $region3: #{tpu_custom_call.1} parent=1 // loop_header
      %s16 = sphi 0, %s20
      %p17 = scmp.ge.s32.totalorder %s16, 4
      %s26 = sphi 0, %s28
      %s29 = sphi 0, %s26
      %s30 = sphi 0, %s29
      %s46 = sphi 0, %s30
      %s50 = sphi 0, %s50
      %s52 = sphi 0, %s50
      %s53 = sphi 0, %s52
      %s67 = sphi 0, %s53
      %s71 = sphi 0, %s71
      %s73 = sphi 0, %s71
      %s74 = sphi 0, %s73
      %s88 = sphi 0, %s74
      %s94 = sphi 0, %s96
      %s97 = sphi 0, %s94
      %s98 = sphi 0, %s97
      %s114 = sphi 0, %s98
    $region4: #{tpu_custom_call.1} parent=1 // loop_header_branch
      %19 = sbr.rel (%p17) target = $region8
    $region5: #{tpu_custom_call.1} parent=1 // loop_body
      %s21 = ssub.s32 %s16, 1
      %s22 = ssub.s32 %s16, 2
      %s23 = sadd.s32 %s16, 1
      %s24 = ssub.s32 %s16, %s23
      %p25 = scmp.eq.s32.totalorder %s24, 0
      %s27 = sadd.s32 %s26, 1
      %s28 = scalar_select %p25, %s26, %s27
      %p31 = pneg %p25
      %p32 = scmp.eq.s32.totalorder %s16, 1
      %p33 = por %p31, %p32
      %p34 = scmp.ne.s32.totalorder %s26, %s29
      %p35 = scmp.eq.s32.totalorder %s16, 0
      %p36 = por %p34, %p35
      %p37 = scmp.ne.s32.totalorder %s26, %s29
      %p38 = scmp.eq.s32.totalorder %s21, 1
      %p39 = por %p37, %p38
      %p40 = scmp.ne.s32.totalorder %s29, %s30
      %p41 = scmp.eq.s32.totalorder %s21, 0
      %p42 = por %p40, %p41
      %p43 = scmp.ne.s32.totalorder %s29, %s30
      %p44 = scmp.eq.s32.totalorder %s22, 1
      %p45 = por %p43, %p44
      %p47 = scmp.ne.s32.totalorder %s30, %s46
      %p48 = scmp.eq.s32.totalorder %s22, 0
      %p49 = por %p47, %p48
      %s51 = sadd.s32 %s50, 1
      %p54 = scmp.eq.s32.totalorder %s16, 1
      %p55 = scmp.ne.s32.totalorder %s50, %s52
      %p56 = scmp.eq.s32.totalorder %s16, 0
      %p57 = por %p55, %p56
      %p58 = scmp.ne.s32.totalorder %s50, %s52
      %p59 = scmp.eq.s32.totalorder %s21, 1
      %p60 = por %p58, %p59
      %p61 = scmp.ne.s32.totalorder %s52, %s53
      %p62 = scmp.eq.s32.totalorder %s21, 0
      %p63 = por %p61, %p62
      %p64 = scmp.ne.s32.totalorder %s52, %s53
      %p65 = scmp.eq.s32.totalorder %s22, 1
      %p66 = por %p64, %p65
      %p68 = scmp.ne.s32.totalorder %s53, %s67
      %p69 = scmp.eq.s32.totalorder %s22, 0
      %p70 = por %p68, %p69
      %s72 = sadd.s32 %s71, 1
      %p75 = scmp.eq.s32.totalorder %s16, 1
      %p76 = scmp.ne.s32.totalorder %s71, %s73
      %p77 = scmp.eq.s32.totalorder %s16, 0
      %p78 = por %p76, %p77
      %p79 = scmp.ne.s32.totalorder %s71, %s73
      %p80 = scmp.eq.s32.totalorder %s21, 1
      %p81 = por %p79, %p80
      %p82 = scmp.ne.s32.totalorder %s73, %s74
      %p83 = scmp.eq.s32.totalorder %s21, 0
      %p84 = por %p82, %p83
      %p85 = scmp.ne.s32.totalorder %s73, %s74
      %p86 = scmp.eq.s32.totalorder %s22, 1
      %p87 = por %p85, %p86
      %p89 = scmp.ne.s32.totalorder %s74, %s88
      %p90 = scmp.eq.s32.totalorder %s22, 0
      %p91 = por %p89, %p90
      %s92 = ssub.s32 %s16, %s23
      %p93 = scmp.eq.s32.totalorder %s92, 0
      %s95 = sadd.s32 %s94, 1
      %s96 = scalar_select %p93, %s94, %s95
      %p99 = pneg %p93
      %p100 = scmp.eq.s32.totalorder %s16, 1
      %p101 = por %p99, %p100
      %p102 = scmp.ne.s32.totalorder %s94, %s97
      %p103 = scmp.eq.s32.totalorder %s16, 0
      %p104 = por %p102, %p103
      %p105 = scmp.ne.s32.totalorder %s94, %s97
      %p106 = scmp.eq.s32.totalorder %s21, 1
      %p107 = por %p105, %p106
      %p108 = scmp.ne.s32.totalorder %s97, %s98
      %p109 = scmp.eq.s32.totalorder %s21, 0
      %p110 = por %p108, %p109
      %p111 = scmp.ne.s32.totalorder %s97, %s98
      %p112 = scmp.eq.s32.totalorder %s22, 1
      %p113 = por %p111, %p112
      %p115 = scmp.ne.s32.totalorder %s98, %s114
      %p116 = scmp.eq.s32.totalorder %s22, 0
      %p117 = por %p115, %p116
      %p118 = scmp.le.s32.totalorder 1, %s16
      %p119 = scmp.lt.s32.totalorder %s16, 3
      %p120 = pnand %p118, %p119
      %p121 = pneg %p120
      // Predicated region
      $region9: #{tpu_custom_call.1} parent=5 // pred_check
        _
      $region10: #{tpu_custom_call.1} parent=5 // pred_check_branch
        %123 = sbr.rel (%p120) target = $region12
      $region11: #{tpu_custom_call.1} parent=5 // pred_region
        %s124 = ssub.s32 %s16, 1
        // Predicated region
        $region13: #{tpu_custom_call.1} parent=11 // pred_check
          %p125 = pneg %p63
        $region14: #{tpu_custom_call.1} parent=11 // pred_check_branch
          %127 = sbr.rel (%p125) target = $region16
        $region15: #{tpu_custom_call.1} parent=11 // pred_region
          %129 = vsyncadd [#allocation6], 0
          %s130 = sshll.u32 %s1, 4
          %s131 = int_to_ptr.hbm [resolvable:$true] %s130
          %s132 = sshll.u32 [#allocation5], 4
          %s133 = int_to_ptr.vmem [resolvable:$true] %s132
          %138 = dma.hbm_to_vmem [thread:$0]  %s131, 512, %s133, [#allocation6], 128, 128, 8
        $region16: #{tpu_custom_call.1} parent=11 // pred_fallthru
          _
        // Predicated region
        $region17: #{tpu_custom_call.1} parent=11 // pred_check
          %p139 = pneg %p84
        $region18: #{tpu_custom_call.1} parent=11 // pred_check_branch
          %141 = sbr.rel (%p139) target = $region20
        $region19: #{tpu_custom_call.1} parent=11 // pred_region
          _
        $region20: #{tpu_custom_call.1} parent=11 // pred_fallthru
          _
      $region12: #{tpu_custom_call.1} parent=5 // pred_fallthru
        _
      %p142 = scmp.lt.s32.totalorder %s16, 2
      // Predicated region
      $region21: #{tpu_custom_call.1} parent=5 // pred_check
        %p143 = pneg %p142
      $region22: #{tpu_custom_call.1} parent=5 // pred_check_branch
        %145 = sbr.rel (%p143) target = $region24
      $region23: #{tpu_custom_call.1} parent=5 // pred_region
        // Predicated region
        $region25: #{tpu_custom_call.1} parent=23 // pred_check
          %p146 = pneg %p36
        $region26: #{tpu_custom_call.1} parent=23 // pred_check_branch
          %148 = sbr.rel (%p146) target = $region28
        $region27: #{tpu_custom_call.1} parent=23 // pred_region
          %s149 = sand.u32 %s26, 1
          %s150 = scalar_lea.sflag [#allocation3], %s149
          %s151 = sand.u32 %s26, 1
          %s152 = smul.addr %s151, 8
          %s153 = scalar_lea.vmem [#allocation2], %s152
          %155 = vsyncadd %s150, 0
          %s156 = smul.addr %s16, 8
          %s157 = scalar_lea.hbm %s0, %s156
          %s159 = sshll.u32 %s157, 4
          %s160 = int_to_ptr.hbm [resolvable:$true] %s159
          %s161 = sshll.u32 %s153, 4
          %s162 = int_to_ptr.vmem [resolvable:$true] %s161
          %164 = dma.hbm_to_vmem [thread:$0]  %s160, 128, %s162, %s150
        $region28: #{tpu_custom_call.1} parent=23 // pred_fallthru
          _
      $region24: #{tpu_custom_call.1} parent=5 // pred_fallthru
        _
      %p165 = scmp.le.s32.totalorder 1, %s16
      %p166 = scmp.lt.s32.totalorder %s16, 3
      %p167 = pnand %p165, %p166
      %p168 = pneg %p167
      // Predicated region
      $region29: #{tpu_custom_call.1} parent=5 // pred_check
        _
      $region30: #{tpu_custom_call.1} parent=5 // pred_check_branch
        %170 = sbr.rel (%p167) target = $region32
      $region31: #{tpu_custom_call.1} parent=5 // pred_region
        %s171 = ssub.s32 %s16, 1
        %s172 = sand.u32 %s29, 1
        %s173 = scalar_lea.sflag [#allocation3], %s172
        %s174 = sand.u32 %s29, 1
        %s175 = smul.addr %s174, 8
        %s176 = scalar_lea.vmem [#allocation2], %s175
        // Predicated region
        $region33: #{tpu_custom_call.1} parent=31 // pred_check
          %p177 = pneg %p42
        $region34: #{tpu_custom_call.1} parent=31 // pred_check_branch
          %179 = sbr.rel (%p177) target = $region36
        $region35: #{tpu_custom_call.1} parent=31 // pred_region
          %181 = dma.done %s173, 128
        $region36: #{tpu_custom_call.1} parent=31 // pred_fallthru
          _
        // Predicated region
        $region37: #{tpu_custom_call.1} parent=31 // pred_check
          %p182 = pneg %p63
        $region38: #{tpu_custom_call.1} parent=31 // pred_check_branch
          %184 = sbr.rel (%p182) target = $region40
        $region39: #{tpu_custom_call.1} parent=31 // pred_region
          %186 = dma.done [#allocation6], 512
        $region40: #{tpu_custom_call.1} parent=31 // pred_fallthru
          _
        %s187 = sand.u32 %s29, 1
        %s188 = scalar_lea.sflag [#allocation3], %s187
        %s189 = sand.u32 %s29, 1
        %s190 = smul.addr %s189, 8
        %s191 = scalar_lea.vmem [#allocation2], %s190
        %p192 = pneg %p42
        %p193 = pneg %p39
        %p194 = pneg %p63
        %p195 = pneg %p60
        %p196 = pneg %p84
        %p197 = pneg %p81
        %p198 = pneg %p110
        %p199 = pneg %p107
        %s200 = sand.u32 %s97, 1
        %s201 = scalar_lea.sflag [#allocation4], %s200
        %s202 = sand.u32 %s97, 1
        %s203 = smul.addr %s202, 8
        %s204 = scalar_lea.vmem [#allocation7], %s203
        %v205 = vld [vmem:[%s176] sm:$0xff]
        %v206 = vld [vmem:[#allocation5] sm:$0xff]
        %v207 = vld [vmem:[#allocation5 + $0x8] sm:$0xff]
        %v208 = vld [vmem:[#allocation5 + $0x10] sm:$0xff]
        %v209 = vld [vmem:[#allocation5 + $0x18] sm:$0xff]
        %v210 = vld [vmem:[%s2] sm:$0x1]
        %v212 = vperm.slane %v210, 0
        %vm214 = vcmask 261120
        %v216 = vsel %vm214, %v205, 0
        %218 = vmatpush.msra.mxu0 0.0
        %219 = vmatpush.msra.mxu0 0.0
        %220 = vmatpush.msra.mxu0 0.0
        %221 = vmatpush.msra.mxu0 0.0
        %222 = vmatpush.msra.mxu0 0.0
        %223 = vmatpush.msra.mxu0 0.0
        %224 = vmatpush.msra.mxu0 0.0
        %225 = vmatpush.msra.mxu0 0.0
        %226 = vmatpush.msra.mxu0 0.0
        %227 = vmatpush.msra.mxu0 0.0
        %228 = vmatpush.msra.mxu0 0.0
        %229 = vmatpush.msra.mxu0 0.0
        %230 = vmatpush.msra.mxu0 %v209
        %231 = vmatpush.msra.mxu0 %v208
        %232 = vmatpush.msra.mxu0 %v207
        %233 = vmatpush.msra.mxu0 %v206
        %234 = vmatmul.f32.gmra.mxu0 %v216
        %v235 = vpop.f32.mrf.mxu0
        %v236 = vadd.f32 %v212, %v235
        %237 = vdwg.mxu0
        %238 = vst.msk [vmem:[%s204] sm:$0xff] %vm214, %v236
        %s239 = sand.u32 %s97, 1
        %s240 = scalar_lea.sflag [#allocation4], %s239
        %s241 = sand.u32 %s97, 1
        %s242 = smul.addr %s241, 8
        %s243 = scalar_lea.vmem [#allocation7], %s242
        // Predicated region
        $region41: #{tpu_custom_call.1} parent=31 // pred_check
          %p244 = pneg %p107
        $region42: #{tpu_custom_call.1} parent=31 // pred_check_branch
          %246 = sbr.rel (%p244) target = $region44
        $region43: #{tpu_custom_call.1} parent=31 // pred_region
          %248 = vsyncadd %s240, 0
          %s249 = smul.addr %s21, 8
          %s250 = scalar_lea.hbm %s3, %s249
          %s252 = sshll.u32 %s243, 4
          %s253 = int_to_ptr.vmem [resolvable:$true] %s252
          %s254 = sshll.u32 %s250, 4
          %s255 = int_to_ptr.hbm [resolvable:$true] %s254
          %257 = dma.vmem_to_hbm [thread:$0]  %s253, 128, %s255, %s240
        $region44: #{tpu_custom_call.1} parent=31 // pred_fallthru
          _
      $region32: #{tpu_custom_call.1} parent=5 // pred_fallthru
        _
      %p258 = scmp.le.s32.totalorder 2, %s16
      // Predicated region
      $region45: #{tpu_custom_call.1} parent=5 // pred_check
        %p259 = pneg %p258
      $region46: #{tpu_custom_call.1} parent=5 // pred_check_branch
        %261 = sbr.rel (%p259) target = $region48
      $region47: #{tpu_custom_call.1} parent=5 // pred_region
        %s262 = ssub.s32 %s16, 2
        // Predicated region
        $region49: #{tpu_custom_call.1} parent=47 // pred_check
          %p263 = pneg %p113
        $region50: #{tpu_custom_call.1} parent=47 // pred_check_branch
          %265 = sbr.rel (%p263) target = $region52
        $region51: #{tpu_custom_call.1} parent=47 // pred_region
          %s266 = sand.u32 %s98, 1
          %s267 = scalar_lea.sflag [#allocation4], %s266
          %s268 = sand.u32 %s98, 1
          %s269 = smul.addr %s268, 8
          %s270 = scalar_lea.vmem [#allocation7], %s269
          %272 = dma.done %s267, 128
        $region52: #{tpu_custom_call.1} parent=47 // pred_fallthru
          _
      $region48: #{tpu_custom_call.1} parent=5 // pred_fallthru
        _
    $region6: #{tpu_custom_call.1} parent=1 // loop_footer
      %s20 = sadd.s32 1, %s16
    $region7: #{tpu_custom_call.1} parent=1 // loop_footer_branch
      %15 = sbr.rel target = $region3
    $region8: #{tpu_custom_call.1} parent=1 // loop_exit
      _
    %273 = vsyncpa [#allocation3], 1
    %s274 = scalar_lea.sflag [#allocation3], 1
    %275 = vsyncpa %s274, 1
    %276 = vsyncpa [#allocation6], 1
    %277 = vsyncpa [#allocation4], 1
    %s278 = scalar_lea.sflag [#allocation4], 1
    %279 = vsyncpa %s278, 1

</llo_original>
